<compile_context>
chip_gen: v7x
topology: tpu7x:2x2x1
jax: 0.10.0
libtpu: 0.0.40
codegen_flags: <defaults>
</compile_context>

<pallas_src>
import functools
import math

import jax
import jax.numpy as jnp
from jax import lax
from jax.experimental import pallas as pl
from jax.experimental.pallas import tpu as pltpu


def _token_embedding_gather_kernel(ids_ref, emb_hbm, out_ref, sems, *, tn, ch, scale):
    # ids_ref : (N_pad,) int32 token ids in SMEM (scalar prefetch, pre-clamped in wrapper)
    # emb_hbm : (V, E) embedding table, left in HBM (memory_space=pl.ANY)
    # out_ref : (TN, E) output block in VMEM -- gather destination, scaled in place
    # sems    : (n_chunks,) DMA semaphores; rows of chunk c signal sems[c]
    i = pl.program_id(0)
    base = i * tn
    n_chunks = tn // ch

    def row_copy(r, c):
        tok = ids_ref[base + r]                       # pre-clamped in wrapper
        return pltpu.make_async_copy(emb_hbm.at[tok], out_ref.at[r], sems.at[c])

    # Phase 1: issue ALL tn row gathers back-to-back (deep DMA concurrency; per-row
    # latency is hidden). Moderately unrolled fori_loop keeps the instruction count sane.
    for c in range(n_chunks):                         # static, small
        def _issue(j, carry, c=c):
            row_copy(c * ch + j, c).start()
            return carry
        lax.fori_loop(0, ch, _issue, 0, unroll=8)

    # Phase 2: wait + scale chunk-by-chunk so the VPU scale of already-arrived chunks
    # overlaps DMA completion of later chunks (no full barrier at the end of the gather).
    for c in range(n_chunks):
        def _wait(j, carry, c=c):
            row_copy(c * ch + j, c).wait()            # same descriptor as the start
            return carry
        lax.fori_loop(0, ch, _wait, 0, unroll=8)
        sl = pl.ds(c * ch, ch)
        out_ref[sl, :] = (out_ref[sl, :].astype(jnp.float32) * scale).astype(out_ref.dtype)


def token_embedding(tokens: jax.Array, emb_table: jax.Array, *,
                    tokens_per_tile: int | None = None) -> jax.Array:
    """Equivalent of TokenEmbedding.forward: embedding(tokens.long()) * sqrt(E)."""
    B, S = tokens.shape
    V, E = emb_table.shape
    N = B * S
    itemsize = jnp.dtype(emb_table.dtype).itemsize

    # --- token-tile size -----------------------------------------------------------
    if tokens_per_tile is None:
        # ~1 MiB of gathered rows per tile: amortizes grid-step overhead, puts hundreds
        # of row DMAs in flight; scales inversely with E*itemsize. Clamp to [64, 1024].
        TN = max(64, min(1024, (1 << 20) // max(1, E * itemsize)))
        TN = max(8, (TN // 8) * 8)
    else:
        TN = tokens_per_tile
        assert TN % 8 == 0, "tokens_per_tile must be a multiple of 8 (sublane tiling)"
    if N > 8:
        # Keep >= 2 token tiles so ("parallel",) can shard the grid across both v7x TCs.
        TN = min(TN, ((pl.cdiv(N, 2) + 7) // 8) * 8)
    else:
        TN = 8

    CH = 32 if TN % 32 == 0 else 8                    # wait/scale sub-chunk (divides TN)
    n_chunks = TN // CH
    n_tiles = pl.cdiv(N, TN)
    N_pad = n_tiles * TN

    ids = tokens.reshape(N).astype(jnp.int32)         # tokens.long()
    if N_pad != N:
        ids = jnp.pad(ids, (0, N_pad - N))            # padded lookups fetch row 0, then dropped
    # Hoisted OOB guard: a bad id must never become a wild HBM read.
    # TODO(synk): nn.Embedding raises on out-of-range ids; we clamp to [0, V-1] instead.
    ids = jnp.clip(ids, 0, V - 1)

    scale = math.sqrt(E)
    out_dtype = emb_table.dtype                       # keep table precision (bf16 table -> bf16 out)

    kernel = functools.partial(_token_embedding_gather_kernel, tn=TN, ch=CH, scale=scale)

    grid_spec = pltpu.PrefetchScalarGridSpec(
        num_scalar_prefetch=1,                        # ids -> SMEM, visible to kernel & index_maps
        grid=(n_tiles,),
        in_specs=[pl.BlockSpec(memory_space=pl.ANY)], # table stays in HBM, no auto-DMA
        out_specs=pl.BlockSpec((TN, E), lambda i, ids: (i, 0)),   # lane-dense output tile
        scratch_shapes=[pltpu.SemaphoreType.DMA((n_chunks,))],    # one sem per row-chunk
    )

    tile_bytes = TN * E * itemsize
    # Output block is double-buffered by the pipeline; there is no separate row scratch.
    # Cap the scoped limit at 48 MiB so the config also fits v7x's 64 MiB physical VMEM.
    vmem_limit = int(min(48 * 1024 * 1024, max(4 * 1024 * 1024, 4 * tile_bytes)))

    # Traffic is O(N*E) bytes (rows in + rows out) + ids; FLOPs are just the scale.
    cost = pl.CostEstimate(
        flops=N_pad * E,
        transcendentals=0,
        bytes_accessed=2 * N_pad * E * itemsize + N_pad * 4,
    )

    out = pl.pallas_call(
        kernel,
        out_shape=jax.ShapeDtypeStruct((N_pad, E), out_dtype),
        grid_spec=grid_spec,
        compiler_params=pltpu.CompilerParams(
            dimension_semantics=("parallel",),        # independent token tiles (v7x megacore)
            vmem_limit_bytes=vmem_limit,
        ),
        cost_estimate=cost,
    )(ids, emb_table)

    return out[:N].reshape(B, S, E)


if __name__ == "__main__":
    # Small, deterministic setup consistent with the module.
    # emb_size = 128 so the output tile is lane-dense (unmasked vst path).
    vocab_size = 512
    emb_size = 128
    batch, seq = 2, 8

    key = jax.random.PRNGKey(0)
    k_emb, k_tok = jax.random.split(key)

    # nn.Embedding default init: weight ~ N(0, 1)
    emb_table = jax.random.normal(k_emb, (vocab_size, emb_size), dtype=jnp.float32)
    tokens = jax.random.randint(k_tok, (batch, seq), 0, vocab_size, dtype=jnp.int32)

    out = token_embedding(tokens, emb_table)
    out = jax.block_until_ready(out)

    # Pure-JAX reference check.
    ref = jnp.take(emb_table, tokens, axis=0) * math.sqrt(emb_size)
    assert out.shape == (batch, seq, emb_size)
    assert out.dtype == jnp.float32
    assert jnp.allclose(out, ref, atol=1e-5, rtol=1e-5)

    print("KERNEL_OK")
</pallas_src>

<mosaic_0001>
module attributes {stable_mosaic.version = 11 : i64} {
  func.func @_token_embedding_gather_kernel(%arg0: i32, %arg1: memref<16xi32, #tpu.memory_space<smem>>, %arg2: memref<512x128xf32, #tpu.memory_space<any>>, %arg3: memref<8x128xf32, #tpu.memory_space<vmem>>, %arg4: memref<1x!tpu.dma_semaphore, #tpu.memory_space<semaphore_mem>>) attributes {dimension_semantics = [#tpu.dimension_semantics<parallel>], iteration_bounds = array<i64: 2>, scalar_prefetch = 1 : i64, scratch_operands = 1 : i64, tpu.core_type = #tpu.core_type<tc>, window_params = [{}, {transform_indices = @transform_1, window_bounds = array<i64: 8, 128>}]} {
    %c8_i32 = arith.constant 8 : i32
    %0 = arith.muli %arg0, %c8_i32 : i32
    %c0_i32 = arith.constant 0 : i32
    %c0_i32_0 = arith.constant 0 : i32
    %1 = arith.addi %c0_i32_0, %c0_i32 : i32
    %2 = arith.addi %0, %1 : i32
    %3 = arith.index_cast %2 : i32 to index
    %4 = memref.load %arg1[%3] : memref<16xi32, #tpu.memory_space<smem>>
    %c0_i32_1 = arith.constant 0 : i32
    %c0_i32_2 = arith.constant 0 : i32
    %5 = tpu.memref_slice %arg2[%4, %c0_i32_2] : memref<512x128xf32, #tpu.memory_space<any>> -> memref<1x128xf32, #tpu.memory_space<any>>
    %6 = tpu.memref_squeeze %5 : memref<1x128xf32, #tpu.memory_space<any>> -> memref<128xf32, #tpu.memory_space<any>>
    %c0_i32_3 = arith.constant 0 : i32
    %7 = tpu.memref_slice %arg3[%1, %c0_i32_3] : memref<8x128xf32, #tpu.memory_space<vmem>> -> memref<1x128xf32, #tpu.memory_space<vmem>>
    %8 = tpu.memref_squeeze %7 : memref<1x128xf32, #tpu.memory_space<vmem>> -> memref<128xf32, #tpu.memory_space<vmem>>
    %9 = tpu.memref_slice %arg4[%c0_i32_1] : memref<1x!tpu.dma_semaphore, #tpu.memory_space<semaphore_mem>> -> memref<1x!tpu.dma_semaphore, #tpu.memory_space<semaphore_mem>>
    %10 = tpu.memref_squeeze %9 : memref<1x!tpu.dma_semaphore, #tpu.memory_space<semaphore_mem>> -> memref<!tpu.dma_semaphore, #tpu.memory_space<semaphore_mem>>
    tpu.enqueue_dma source(%6 : memref<128xf32, #tpu.memory_space<any>>) target(%8 : memref<128xf32, #tpu.memory_space<vmem>>) target_semaphore(%10 : memref<!tpu.dma_semaphore, #tpu.memory_space<semaphore_mem>>)
    %c1_i32 = arith.constant 1 : i32
    %c0_i32_4 = arith.constant 0 : i32
    %11 = arith.addi %c0_i32_4, %c1_i32 : i32
    %12 = arith.addi %0, %11 : i32
    %13 = arith.index_cast %12 : i32 to index
    %14 = memref.load %arg1[%13] : memref<16xi32, #tpu.memory_space<smem>>
    %c0_i32_5 = arith.constant 0 : i32
    %c0_i32_6 = arith.constant 0 : i32
    %15 = tpu.memref_slice %arg2[%14, %c0_i32_6] : memref<512x128xf32, #tpu.memory_space<any>> -> memref<1x128xf32, #tpu.memory_space<any>>
    %16 = tpu.memref_squeeze %15 : memref<1x128xf32, #tpu.memory_space<any>> -> memref<128xf32, #tpu.memory_space<any>>
    %c0_i32_7 = arith.constant 0 : i32
    %17 = tpu.memref_slice %arg3[%11, %c0_i32_7] : memref<8x128xf32, #tpu.memory_space<vmem>> -> memref<1x128xf32, #tpu.memory_space<vmem>>
    %18 = tpu.memref_squeeze %17 : memref<1x128xf32, #tpu.memory_space<vmem>> -> memref<128xf32, #tpu.memory_space<vmem>>
    %19 = tpu.memref_slice %arg4[%c0_i32_5] : memref<1x!tpu.dma_semaphore, #tpu.memory_space<semaphore_mem>> -> memref<1x!tpu.dma_semaphore, #tpu.memory_space<semaphore_mem>>
    %20 = tpu.memref_squeeze %19 : memref<1x!tpu.dma_semaphore, #tpu.memory_space<semaphore_mem>> -> memref<!tpu.dma_semaphore, #tpu.memory_space<semaphore_mem>>
    tpu.enqueue_dma source(%16 : memref<128xf32, #tpu.memory_space<any>>) target(%18 : memref<128xf32, #tpu.memory_space<vmem>>) target_semaphore(%20 : memref<!tpu.dma_semaphore, #tpu.memory_space<semaphore_mem>>)
    %c2_i32 = arith.constant 2 : i32
    %c0_i32_8 = arith.constant 0 : i32
    %21 = arith.addi %c0_i32_8, %c2_i32 : i32
    %22 = arith.addi %0, %21 : i32
    %23 = arith.index_cast %22 : i32 to index
    %24 = memref.load %arg1[%23] : memref<16xi32, #tpu.memory_space<smem>>
    %c0_i32_9 = arith.constant 0 : i32
    %c0_i32_10 = arith.constant 0 : i32
    %25 = tpu.memref_slice %arg2[%24, %c0_i32_10] : memref<512x128xf32, #tpu.memory_space<any>> -> memref<1x128xf32, #tpu.memory_space<any>>
    %26 = tpu.memref_squeeze %25 : memref<1x128xf32, #tpu.memory_space<any>> -> memref<128xf32, #tpu.memory_space<any>>
    %c0_i32_11 = arith.constant 0 : i32
    %27 = tpu.memref_slice %arg3[%21, %c0_i32_11] : memref<8x128xf32, #tpu.memory_space<vmem>> -> memref<1x128xf32, #tpu.memory_space<vmem>>
    %28 = tpu.memref_squeeze %27 : memref<1x128xf32, #tpu.memory_space<vmem>> -> memref<128xf32, #tpu.memory_space<vmem>>
    %29 = tpu.memref_slice %arg4[%c0_i32_9] : memref<1x!tpu.dma_semaphore, #tpu.memory_space<semaphore_mem>> -> memref<1x!tpu.dma_semaphore, #tpu.memory_space<semaphore_mem>>
    %30 = tpu.memref_squeeze %29 : memref<1x!tpu.dma_semaphore, #tpu.memory_space<semaphore_mem>> -> memref<!tpu.dma_semaphore, #tpu.memory_space<semaphore_mem>>
    tpu.enqueue_dma source(%26 : memref<128xf32, #tpu.memory_space<any>>) target(%28 : memref<128xf32, #tpu.memory_space<vmem>>) target_semaphore(%30 : memref<!tpu.dma_semaphore, #tpu.memory_space<semaphore_mem>>)
    %c3_i32 = arith.constant 3 : i32
    %c0_i32_12 = arith.constant 0 : i32
    %31 = arith.addi %c0_i32_12, %c3_i32 : i32
    %32 = arith.addi %0, %31 : i32
    %33 = arith.index_cast %32 : i32 to index
    %34 = memref.load %arg1[%33] : memref<16xi32, #tpu.memory_space<smem>>
    %c0_i32_13 = arith.constant 0 : i32
    %c0_i32_14 = arith.constant 0 : i32
    %35 = tpu.memref_slice %arg2[%34, %c0_i32_14] : memref<512x128xf32, #tpu.memory_space<any>> -> memref<1x128xf32, #tpu.memory_space<any>>
    %36 = tpu.memref_squeeze %35 : memref<1x128xf32, #tpu.memory_space<any>> -> memref<128xf32, #tpu.memory_space<any>>
    %c0_i32_15 = arith.constant 0 : i32
    %37 = tpu.memref_slice %arg3[%31, %c0_i32_15] : memref<8x128xf32, #tpu.memory_space<vmem>> -> memref<1x128xf32, #tpu.memory_space<vmem>>
    %38 = tpu.memref_squeeze %37 : memref<1x128xf32, #tpu.memory_space<vmem>> -> memref<128xf32, #tpu.memory_space<vmem>>
    %39 = tpu.memref_slice %arg4[%c0_i32_13] : memref<1x!tpu.dma_semaphore, #tpu.memory_space<semaphore_mem>> -> memref<1x!tpu.dma_semaphore, #tpu.memory_space<semaphore_mem>>
    %40 = tpu.memref_squeeze %39 : memref<1x!tpu.dma_semaphore, #tpu.memory_space<semaphore_mem>> -> memref<!tpu.dma_semaphore, #tpu.memory_space<semaphore_mem>>
    tpu.enqueue_dma source(%36 : memref<128xf32, #tpu.memory_space<any>>) target(%38 : memref<128xf32, #tpu.memory_space<vmem>>) target_semaphore(%40 : memref<!tpu.dma_semaphore, #tpu.memory_space<semaphore_mem>>)
    %c4_i32 = arith.constant 4 : i32
    %c0_i32_16 = arith.constant 0 : i32
    %41 = arith.addi %c0_i32_16, %c4_i32 : i32
    %42 = arith.addi %0, %41 : i32
    %43 = arith.index_cast %42 : i32 to index
    %44 = memref.load %arg1[%43] : memref<16xi32, #tpu.memory_space<smem>>
    %c0_i32_17 = arith.constant 0 : i32
    %c0_i32_18 = arith.constant 0 : i32
    %45 = tpu.memref_slice %arg2[%44, %c0_i32_18] : memref<512x128xf32, #tpu.memory_space<any>> -> memref<1x128xf32, #tpu.memory_space<any>>
    %46 = tpu.memref_squeeze %45 : memref<1x128xf32, #tpu.memory_space<any>> -> memref<128xf32, #tpu.memory_space<any>>
    %c0_i32_19 = arith.constant 0 : i32
    %47 = tpu.memref_slice %arg3[%41, %c0_i32_19] : memref<8x128xf32, #tpu.memory_space<vmem>> -> memref<1x128xf32, #tpu.memory_space<vmem>>
    %48 = tpu.memref_squeeze %47 : memref<1x128xf32, #tpu.memory_space<vmem>> -> memref<128xf32, #tpu.memory_space<vmem>>
    %49 = tpu.memref_slice %arg4[%c0_i32_17] : memref<1x!tpu.dma_semaphore, #tpu.memory_space<semaphore_mem>> -> memref<1x!tpu.dma_semaphore, #tpu.memory_space<semaphore_mem>>
    %50 = tpu.memref_squeeze %49 : memref<1x!tpu.dma_semaphore, #tpu.memory_space<semaphore_mem>> -> memref<!tpu.dma_semaphore, #tpu.memory_space<semaphore_mem>>
    tpu.enqueue_dma source(%46 : memref<128xf32, #tpu.memory_space<any>>) target(%48 : memref<128xf32, #tpu.memory_space<vmem>>) target_semaphore(%50 : memref<!tpu.dma_semaphore, #tpu.memory_space<semaphore_mem>>)
    %c5_i32 = arith.constant 5 : i32
    %c0_i32_20 = arith.constant 0 : i32
    %51 = arith.addi %c0_i32_20, %c5_i32 : i32
    %52 = arith.addi %0, %51 : i32
    %53 = arith.index_cast %52 : i32 to index
    %54 = memref.load %arg1[%53] : memref<16xi32, #tpu.memory_space<smem>>
    %c0_i32_21 = arith.constant 0 : i32
    %c0_i32_22 = arith.constant 0 : i32
    %55 = tpu.memref_slice %arg2[%54, %c0_i32_22] : memref<512x128xf32, #tpu.memory_space<any>> -> memref<1x128xf32, #tpu.memory_space<any>>
    %56 = tpu.memref_squeeze %55 : memref<1x128xf32, #tpu.memory_space<any>> -> memref<128xf32, #tpu.memory_space<any>>
    %c0_i32_23 = arith.constant 0 : i32
    %57 = tpu.memref_slice %arg3[%51, %c0_i32_23] : memref<8x128xf32, #tpu.memory_space<vmem>> -> memref<1x128xf32, #tpu.memory_space<vmem>>
    %58 = tpu.memref_squeeze %57 : memref<1x128xf32, #tpu.memory_space<vmem>> -> memref<128xf32, #tpu.memory_space<vmem>>
    %59 = tpu.memref_slice %arg4[%c0_i32_21] : memref<1x!tpu.dma_semaphore, #tpu.memory_space<semaphore_mem>> -> memref<1x!tpu.dma_semaphore, #tpu.memory_space<semaphore_mem>>
    %60 = tpu.memref_squeeze %59 : memref<1x!tpu.dma_semaphore, #tpu.memory_space<semaphore_mem>> -> memref<!tpu.dma_semaphore, #tpu.memory_space<semaphore_mem>>
    tpu.enqueue_dma source(%56 : memref<128xf32, #tpu.memory_space<any>>) target(%58 : memref<128xf32, #tpu.memory_space<vmem>>) target_semaphore(%60 : memref<!tpu.dma_semaphore, #tpu.memory_space<semaphore_mem>>)
    %c6_i32 = arith.constant 6 : i32
    %c0_i32_24 = arith.constant 0 : i32
    %61 = arith.addi %c0_i32_24, %c6_i32 : i32
    %62 = arith.addi %0, %61 : i32
    %63 = arith.index_cast %62 : i32 to index
    %64 = memref.load %arg1[%63] : memref<16xi32, #tpu.memory_space<smem>>
    %c0_i32_25 = arith.constant 0 : i32
    %c0_i32_26 = arith.constant 0 : i32
    %65 = tpu.memref_slice %arg2[%64, %c0_i32_26] : memref<512x128xf32, #tpu.memory_space<any>> -> memref<1x128xf32, #tpu.memory_space<any>>
    %66 = tpu.memref_squeeze %65 : memref<1x128xf32, #tpu.memory_space<any>> -> memref<128xf32, #tpu.memory_space<any>>
    %c0_i32_27 = arith.constant 0 : i32
    %67 = tpu.memref_slice %arg3[%61, %c0_i32_27] : memref<8x128xf32, #tpu.memory_space<vmem>> -> memref<1x128xf32, #tpu.memory_space<vmem>>
    %68 = tpu.memref_squeeze %67 : memref<1x128xf32, #tpu.memory_space<vmem>> -> memref<128xf32, #tpu.memory_space<vmem>>
    %69 = tpu.memref_slice %arg4[%c0_i32_25] : memref<1x!tpu.dma_semaphore, #tpu.memory_space<semaphore_mem>> -> memref<1x!tpu.dma_semaphore, #tpu.memory_space<semaphore_mem>>
    %70 = tpu.memref_squeeze %69 : memref<1x!tpu.dma_semaphore, #tpu.memory_space<semaphore_mem>> -> memref<!tpu.dma_semaphore, #tpu.memory_space<semaphore_mem>>
    tpu.enqueue_dma source(%66 : memref<128xf32, #tpu.memory_space<any>>) target(%68 : memref<128xf32, #tpu.memory_space<vmem>>) target_semaphore(%70 : memref<!tpu.dma_semaphore, #tpu.memory_space<semaphore_mem>>)
    %c7_i32 = arith.constant 7 : i32
    %c0_i32_28 = arith.constant 0 : i32
    %71 = arith.addi %c0_i32_28, %c7_i32 : i32
    %72 = arith.addi %0, %71 : i32
    %73 = arith.index_cast %72 : i32 to index
    %74 = memref.load %arg1[%73] : memref<16xi32, #tpu.memory_space<smem>>
    %c0_i32_29 = arith.constant 0 : i32
    %c0_i32_30 = arith.constant 0 : i32
    %75 = tpu.memref_slice %arg2[%74, %c0_i32_30] : memref<512x128xf32, #tpu.memory_space<any>> -> memref<1x128xf32, #tpu.memory_space<any>>
    %76 = tpu.memref_squeeze %75 : memref<1x128xf32, #tpu.memory_space<any>> -> memref<128xf32, #tpu.memory_space<any>>
    %c0_i32_31 = arith.constant 0 : i32
    %77 = tpu.memref_slice %arg3[%71, %c0_i32_31] : memref<8x128xf32, #tpu.memory_space<vmem>> -> memref<1x128xf32, #tpu.memory_space<vmem>>
    %78 = tpu.memref_squeeze %77 : memref<1x128xf32, #tpu.memory_space<vmem>> -> memref<128xf32, #tpu.memory_space<vmem>>
    %79 = tpu.memref_slice %arg4[%c0_i32_29] : memref<1x!tpu.dma_semaphore, #tpu.memory_space<semaphore_mem>> -> memref<1x!tpu.dma_semaphore, #tpu.memory_space<semaphore_mem>>
    %80 = tpu.memref_squeeze %79 : memref<1x!tpu.dma_semaphore, #tpu.memory_space<semaphore_mem>> -> memref<!tpu.dma_semaphore, #tpu.memory_space<semaphore_mem>>
    tpu.enqueue_dma source(%76 : memref<128xf32, #tpu.memory_space<any>>) target(%78 : memref<128xf32, #tpu.memory_space<vmem>>) target_semaphore(%80 : memref<!tpu.dma_semaphore, #tpu.memory_space<semaphore_mem>>)
    %c8_i32_32 = arith.constant 8 : i32
    %c0_i32_33 = arith.constant 0 : i32
    %c0_i32_34 = arith.constant 0 : i32
    %81 = arith.addi %c0_i32_34, %c0_i32_33 : i32
    %82 = arith.addi %0, %81 : i32
    %83 = arith.index_cast %82 : i32 to index
    %84 = memref.load %arg1[%83] : memref<16xi32, #tpu.memory_space<smem>>
    %c0_i32_35 = arith.constant 0 : i32
    %c0_i32_36 = arith.constant 0 : i32
    %85 = tpu.memref_slice %arg2[%84, %c0_i32_36] : memref<512x128xf32, #tpu.memory_space<any>> -> memref<1x128xf32, #tpu.memory_space<any>>
    %86 = tpu.memref_squeeze %85 : memref<1x128xf32, #tpu.memory_space<any>> -> memref<128xf32, #tpu.memory_space<any>>
    %c0_i32_37 = arith.constant 0 : i32
    %87 = tpu.memref_slice %arg3[%81, %c0_i32_37] : memref<8x128xf32, #tpu.memory_space<vmem>> -> memref<1x128xf32, #tpu.memory_space<vmem>>
    %88 = tpu.memref_squeeze %87 : memref<1x128xf32, #tpu.memory_space<vmem>> -> memref<128xf32, #tpu.memory_space<vmem>>
    %89 = tpu.memref_slice %arg4[%c0_i32_35] : memref<1x!tpu.dma_semaphore, #tpu.memory_space<semaphore_mem>> -> memref<1x!tpu.dma_semaphore, #tpu.memory_space<semaphore_mem>>
    %90 = tpu.memref_squeeze %89 : memref<1x!tpu.dma_semaphore, #tpu.memory_space<semaphore_mem>> -> memref<!tpu.dma_semaphore, #tpu.memory_space<semaphore_mem>>
    tpu.wait_dma2 semaphore(%90 : memref<!tpu.dma_semaphore, #tpu.memory_space<semaphore_mem>>) src(%86 : memref<128xf32, #tpu.memory_space<any>>) dst(%88 : memref<128xf32, #tpu.memory_space<vmem>>)
    %c1_i32_38 = arith.constant 1 : i32
    %c0_i32_39 = arith.constant 0 : i32
    %91 = arith.addi %c0_i32_39, %c1_i32_38 : i32
    %92 = arith.addi %0, %91 : i32
    %93 = arith.index_cast %92 : i32 to index
    %94 = memref.load %arg1[%93] : memref<16xi32, #tpu.memory_space<smem>>
    %c0_i32_40 = arith.constant 0 : i32
    %c0_i32_41 = arith.constant 0 : i32
    %95 = tpu.memref_slice %arg2[%94, %c0_i32_41] : memref<512x128xf32, #tpu.memory_space<any>> -> memref<1x128xf32, #tpu.memory_space<any>>
    %96 = tpu.memref_squeeze %95 : memref<1x128xf32, #tpu.memory_space<any>> -> memref<128xf32, #tpu.memory_space<any>>
    %c0_i32_42 = arith.constant 0 : i32
    %97 = tpu.memref_slice %arg3[%91, %c0_i32_42] : memref<8x128xf32, #tpu.memory_space<vmem>> -> memref<1x128xf32, #tpu.memory_space<vmem>>
    %98 = tpu.memref_squeeze %97 : memref<1x128xf32, #tpu.memory_space<vmem>> -> memref<128xf32, #tpu.memory_space<vmem>>
    %99 = tpu.memref_slice %arg4[%c0_i32_40] : memref<1x!tpu.dma_semaphore, #tpu.memory_space<semaphore_mem>> -> memref<1x!tpu.dma_semaphore, #tpu.memory_space<semaphore_mem>>
    %100 = tpu.memref_squeeze %99 : memref<1x!tpu.dma_semaphore, #tpu.memory_space<semaphore_mem>> -> memref<!tpu.dma_semaphore, #tpu.memory_space<semaphore_mem>>
    tpu.wait_dma2 semaphore(%100 : memref<!tpu.dma_semaphore, #tpu.memory_space<semaphore_mem>>) src(%96 : memref<128xf32, #tpu.memory_space<any>>) dst(%98 : memref<128xf32, #tpu.memory_space<vmem>>)
    %c2_i32_43 = arith.constant 2 : i32
    %c0_i32_44 = arith.constant 0 : i32
    %101 = arith.addi %c0_i32_44, %c2_i32_43 : i32
    %102 = arith.addi %0, %101 : i32
    %103 = arith.index_cast %102 : i32 to index
    %104 = memref.load %arg1[%103] : memref<16xi32, #tpu.memory_space<smem>>
    %c0_i32_45 = arith.constant 0 : i32
    %c0_i32_46 = arith.constant 0 : i32
    %105 = tpu.memref_slice %arg2[%104, %c0_i32_46] : memref<512x128xf32, #tpu.memory_space<any>> -> memref<1x128xf32, #tpu.memory_space<any>>
    %106 = tpu.memref_squeeze %105 : memref<1x128xf32, #tpu.memory_space<any>> -> memref<128xf32, #tpu.memory_space<any>>
    %c0_i32_47 = arith.constant 0 : i32
    %107 = tpu.memref_slice %arg3[%101, %c0_i32_47] : memref<8x128xf32, #tpu.memory_space<vmem>> -> memref<1x128xf32, #tpu.memory_space<vmem>>
    %108 = tpu.memref_squeeze %107 : memref<1x128xf32, #tpu.memory_space<vmem>> -> memref<128xf32, #tpu.memory_space<vmem>>
    %109 = tpu.memref_slice %arg4[%c0_i32_45] : memref<1x!tpu.dma_semaphore, #tpu.memory_space<semaphore_mem>> -> memref<1x!tpu.dma_semaphore, #tpu.memory_space<semaphore_mem>>
    %110 = tpu.memref_squeeze %109 : memref<1x!tpu.dma_semaphore, #tpu.memory_space<semaphore_mem>> -> memref<!tpu.dma_semaphore, #tpu.memory_space<semaphore_mem>>
    tpu.wait_dma2 semaphore(%110 : memref<!tpu.dma_semaphore, #tpu.memory_space<semaphore_mem>>) src(%106 : memref<128xf32, #tpu.memory_space<any>>) dst(%108 : memref<128xf32, #tpu.memory_space<vmem>>)
    %c3_i32_48 = arith.constant 3 : i32
    %c0_i32_49 = arith.constant 0 : i32
    %111 = arith.addi %c0_i32_49, %c3_i32_48 : i32
    %112 = arith.addi %0, %111 : i32
    %113 = arith.index_cast %112 : i32 to index
    %114 = memref.load %arg1[%113] : memref<16xi32, #tpu.memory_space<smem>>
    %c0_i32_50 = arith.constant 0 : i32
    %c0_i32_51 = arith.constant 0 : i32
    %115 = tpu.memref_slice %arg2[%114, %c0_i32_51] : memref<512x128xf32, #tpu.memory_space<any>> -> memref<1x128xf32, #tpu.memory_space<any>>
    %116 = tpu.memref_squeeze %115 : memref<1x128xf32, #tpu.memory_space<any>> -> memref<128xf32, #tpu.memory_space<any>>
    %c0_i32_52 = arith.constant 0 : i32
    %117 = tpu.memref_slice %arg3[%111, %c0_i32_52] : memref<8x128xf32, #tpu.memory_space<vmem>> -> memref<1x128xf32, #tpu.memory_space<vmem>>
    %118 = tpu.memref_squeeze %117 : memref<1x128xf32, #tpu.memory_space<vmem>> -> memref<128xf32, #tpu.memory_space<vmem>>
    %119 = tpu.memref_slice %arg4[%c0_i32_50] : memref<1x!tpu.dma_semaphore, #tpu.memory_space<semaphore_mem>> -> memref<1x!tpu.dma_semaphore, #tpu.memory_space<semaphore_mem>>
    %120 = tpu.memref_squeeze %119 : memref<1x!tpu.dma_semaphore, #tpu.memory_space<semaphore_mem>> -> memref<!tpu.dma_semaphore, #tpu.memory_space<semaphore_mem>>
    tpu.wait_dma2 semaphore(%120 : memref<!tpu.dma_semaphore, #tpu.memory_space<semaphore_mem>>) src(%116 : memref<128xf32, #tpu.memory_space<any>>) dst(%118 : memref<128xf32, #tpu.memory_space<vmem>>)
    %c4_i32_53 = arith.constant 4 : i32
    %c0_i32_54 = arith.constant 0 : i32
    %121 = arith.addi %c0_i32_54, %c4_i32_53 : i32
    %122 = arith.addi %0, %121 : i32
    %123 = arith.index_cast %122 : i32 to index
    %124 = memref.load %arg1[%123] : memref<16xi32, #tpu.memory_space<smem>>
    %c0_i32_55 = arith.constant 0 : i32
    %c0_i32_56 = arith.constant 0 : i32
    %125 = tpu.memref_slice %arg2[%124, %c0_i32_56] : memref<512x128xf32, #tpu.memory_space<any>> -> memref<1x128xf32, #tpu.memory_space<any>>
    %126 = tpu.memref_squeeze %125 : memref<1x128xf32, #tpu.memory_space<any>> -> memref<128xf32, #tpu.memory_space<any>>
    %c0_i32_57 = arith.constant 0 : i32
    %127 = tpu.memref_slice %arg3[%121, %c0_i32_57] : memref<8x128xf32, #tpu.memory_space<vmem>> -> memref<1x128xf32, #tpu.memory_space<vmem>>
    %128 = tpu.memref_squeeze %127 : memref<1x128xf32, #tpu.memory_space<vmem>> -> memref<128xf32, #tpu.memory_space<vmem>>
    %129 = tpu.memref_slice %arg4[%c0_i32_55] : memref<1x!tpu.dma_semaphore, #tpu.memory_space<semaphore_mem>> -> memref<1x!tpu.dma_semaphore, #tpu.memory_space<semaphore_mem>>
    %130 = tpu.memref_squeeze %129 : memref<1x!tpu.dma_semaphore, #tpu.memory_space<semaphore_mem>> -> memref<!tpu.dma_semaphore, #tpu.memory_space<semaphore_mem>>
    tpu.wait_dma2 semaphore(%130 : memref<!tpu.dma_semaphore, #tpu.memory_space<semaphore_mem>>) src(%126 : memref<128xf32, #tpu.memory_space<any>>) dst(%128 : memref<128xf32, #tpu.memory_space<vmem>>)
    %c5_i32_58 = arith.constant 5 : i32
    %c0_i32_59 = arith.constant 0 : i32
    %131 = arith.addi %c0_i32_59, %c5_i32_58 : i32
    %132 = arith.addi %0, %131 : i32
    %133 = arith.index_cast %132 : i32 to index
    %134 = memref.load %arg1[%133] : memref<16xi32, #tpu.memory_space<smem>>
    %c0_i32_60 = arith.constant 0 : i32
    %c0_i32_61 = arith.constant 0 : i32
    %135 = tpu.memref_slice %arg2[%134, %c0_i32_61] : memref<512x128xf32, #tpu.memory_space<any>> -> memref<1x128xf32, #tpu.memory_space<any>>
    %136 = tpu.memref_squeeze %135 : memref<1x128xf32, #tpu.memory_space<any>> -> memref<128xf32, #tpu.memory_space<any>>
    %c0_i32_62 = arith.constant 0 : i32
    %137 = tpu.memref_slice %arg3[%131, %c0_i32_62] : memref<8x128xf32, #tpu.memory_space<vmem>> -> memref<1x128xf32, #tpu.memory_space<vmem>>
    %138 = tpu.memref_squeeze %137 : memref<1x128xf32, #tpu.memory_space<vmem>> -> memref<128xf32, #tpu.memory_space<vmem>>
    %139 = tpu.memref_slice %arg4[%c0_i32_60] : memref<1x!tpu.dma_semaphore, #tpu.memory_space<semaphore_mem>> -> memref<1x!tpu.dma_semaphore, #tpu.memory_space<semaphore_mem>>
    %140 = tpu.memref_squeeze %139 : memref<1x!tpu.dma_semaphore, #tpu.memory_space<semaphore_mem>> -> memref<!tpu.dma_semaphore, #tpu.memory_space<semaphore_mem>>
    tpu.wait_dma2 semaphore(%140 : memref<!tpu.dma_semaphore, #tpu.memory_space<semaphore_mem>>) src(%136 : memref<128xf32, #tpu.memory_space<any>>) dst(%138 : memref<128xf32, #tpu.memory_space<vmem>>)
    %c6_i32_63 = arith.constant 6 : i32
    %c0_i32_64 = arith.constant 0 : i32
    %141 = arith.addi %c0_i32_64, %c6_i32_63 : i32
    %142 = arith.addi %0, %141 : i32
    %143 = arith.index_cast %142 : i32 to index
    %144 = memref.load %arg1[%143] : memref<16xi32, #tpu.memory_space<smem>>
    %c0_i32_65 = arith.constant 0 : i32
    %c0_i32_66 = arith.constant 0 : i32
    %145 = tpu.memref_slice %arg2[%144, %c0_i32_66] : memref<512x128xf32, #tpu.memory_space<any>> -> memref<1x128xf32, #tpu.memory_space<any>>
    %146 = tpu.memref_squeeze %145 : memref<1x128xf32, #tpu.memory_space<any>> -> memref<128xf32, #tpu.memory_space<any>>
    %c0_i32_67 = arith.constant 0 : i32
    %147 = tpu.memref_slice %arg3[%141, %c0_i32_67] : memref<8x128xf32, #tpu.memory_space<vmem>> -> memref<1x128xf32, #tpu.memory_space<vmem>>
    %148 = tpu.memref_squeeze %147 : memref<1x128xf32, #tpu.memory_space<vmem>> -> memref<128xf32, #tpu.memory_space<vmem>>
    %149 = tpu.memref_slice %arg4[%c0_i32_65] : memref<1x!tpu.dma_semaphore, #tpu.memory_space<semaphore_mem>> -> memref<1x!tpu.dma_semaphore, #tpu.memory_space<semaphore_mem>>
    %150 = tpu.memref_squeeze %149 : memref<1x!tpu.dma_semaphore, #tpu.memory_space<semaphore_mem>> -> memref<!tpu.dma_semaphore, #tpu.memory_space<semaphore_mem>>
    tpu.wait_dma2 semaphore(%150 : memref<!tpu.dma_semaphore, #tpu.memory_space<semaphore_mem>>) src(%146 : memref<128xf32, #tpu.memory_space<any>>) dst(%148 : memref<128xf32, #tpu.memory_space<vmem>>)
    %c7_i32_68 = arith.constant 7 : i32
    %c0_i32_69 = arith.constant 0 : i32
    %151 = arith.addi %c0_i32_69, %c7_i32_68 : i32
    %152 = arith.addi %0, %151 : i32
    %153 = arith.index_cast %152 : i32 to index
    %154 = memref.load %arg1[%153] : memref<16xi32, #tpu.memory_space<smem>>
    %c0_i32_70 = arith.constant 0 : i32
    %c0_i32_71 = arith.constant 0 : i32
    %155 = tpu.memref_slice %arg2[%154, %c0_i32_71] : memref<512x128xf32, #tpu.memory_space<any>> -> memref<1x128xf32, #tpu.memory_space<any>>
    %156 = tpu.memref_squeeze %155 : memref<1x128xf32, #tpu.memory_space<any>> -> memref<128xf32, #tpu.memory_space<any>>
    %c0_i32_72 = arith.constant 0 : i32
    %157 = tpu.memref_slice %arg3[%151, %c0_i32_72] : memref<8x128xf32, #tpu.memory_space<vmem>> -> memref<1x128xf32, #tpu.memory_space<vmem>>
    %158 = tpu.memref_squeeze %157 : memref<1x128xf32, #tpu.memory_space<vmem>> -> memref<128xf32, #tpu.memory_space<vmem>>
    %159 = tpu.memref_slice %arg4[%c0_i32_70] : memref<1x!tpu.dma_semaphore, #tpu.memory_space<semaphore_mem>> -> memref<1x!tpu.dma_semaphore, #tpu.memory_space<semaphore_mem>>
    %160 = tpu.memref_squeeze %159 : memref<1x!tpu.dma_semaphore, #tpu.memory_space<semaphore_mem>> -> memref<!tpu.dma_semaphore, #tpu.memory_space<semaphore_mem>>
    tpu.wait_dma2 semaphore(%160 : memref<!tpu.dma_semaphore, #tpu.memory_space<semaphore_mem>>) src(%156 : memref<128xf32, #tpu.memory_space<any>>) dst(%158 : memref<128xf32, #tpu.memory_space<vmem>>)
    %c8_i32_73 = arith.constant 8 : i32
    %c0 = arith.constant 0 : index
    %c0_74 = arith.constant 0 : index
    %161 = vector.load %arg3[%c0, %c0_74] : memref<8x128xf32, #tpu.memory_space<vmem>>, vector<8x128xf32>
    %cst = arith.constant 11.3137083 : f32
    %162 = vector.broadcast %cst : f32 to vector<8x128xf32>
    %163 = arith.mulf %161, %162 : vector<8x128xf32>
    %c0_75 = arith.constant 0 : index
    %c0_76 = arith.constant 0 : index
    %164 = vector.load %arg3[%c0_75, %c0_76] : memref<8x128xf32, #tpu.memory_space<vmem>>, vector<8x128xf32>
    tpu.vector_store %arg3[%c0_75, %c0_76], %163 {strides = array<i32>} : memref<8x128xf32, #tpu.memory_space<vmem>>, vector<8x128xf32>,
    return
  }
  func.func @transform_1(%arg0: i32, %arg1: memref<16xi32, #tpu.memory_space<smem>>) -> (i32, i32) {
    %c0_i32 = arith.constant 0 : i32
    %c0_i32_0 = arith.constant 0 : i32
    return %arg0, %c0_i32 : i32, i32
  }
}

</mosaic_0001>

<llo_original>
// kernel: tpu_custom_call.1
$region0: #{tpu_custom_call.1}
  #allocation0 [shape = 'u32[]', space=smem, size = 0x4, offset = 0x4, fixed_abs, tag = 'smem constant byte address 0x4 - core index']
  #allocation1 [shape = 'u32[144,128]{1,0:T(1,128)}', space=vmem, size = 0x12000, scoped, tag = 'internal scratch']
  #allocation2 [shape = 's32[1]{0}', space=sflag, size = 0x4, scoped, tag = 'scratch operand']
  #allocation3 [shape = 's32[1]{0}', space=sflag, size = 0x4, scoped, tag = 'scoped memory for tpu_custom_call.1']
  #allocation4 [shape = 'u8[512]{0}', space=smem, size = 0x200, scoped, tag = 'prefetched SMEM operand 0']
  #allocation7 [shape = 's32[]', space=sflag, size = 0x4, offset = 0, fixed_abs, tag = 'sflag constant byte address 0x0 - dummy sync flag']
  #allocation8 [shape = 's32[]', space=sflag, size = 0x4, offset = 0, fixed_abs, tag = 'sflag constant byte address 0x0 - dummy sync flag']
  #allocation9 [shape = 'u32[]', space=smem, size = 0x4, offset = 0x44, fixed_abs, tag = 'smem constant byte address 0x44 - assertion arg 0']
  #allocation10 [shape = 'u32[]', space=smem, size = 0x4, offset = 0x48, fixed_abs, tag = 'smem constant byte address 0x48 - assertion arg 1']
  #allocation11 [shape = 's32[]', space=sflag, size = 0x4, offset = 0, fixed_abs, tag = 'sflag constant byte address 0x0 - dummy sync flag']
  #allocation12 [shape = 's32[]', space=sflag, size = 0x4, offset = 0, fixed_abs, tag = 'sflag constant byte address 0x0 - dummy sync flag']
  #allocation13 [shape = 's32[]', space=sflag, size = 0x4, offset = 0, fixed_abs, tag = 'sflag constant byte address 0x0 - dummy sync flag']
  #allocation14 [shape = 's32[]', space=sflag, size = 0x4, offset = 0, fixed_abs, tag = 'sflag constant byte address 0x0 - dummy sync flag']
  #allocation15 [shape = 's32[]', space=sflag, size = 0x4, offset = 0, fixed_abs, tag = 'sflag constant byte address 0x0 - dummy sync flag']
  #allocation16 [shape = 's32[]', space=sflag, size = 0x4, offset = 0, fixed_abs, tag = 'sflag constant byte address 0x0 - dummy sync flag']
  #allocation17 [shape = 's32[]', space=sflag, size = 0x4, offset = 0, fixed_abs, tag = 'sflag constant byte address 0x0 - dummy sync flag']
  #allocation18 [shape = 's32[]', space=sflag, size = 0x4, offset = 0, fixed_abs, tag = 'sflag constant byte address 0x0 - dummy sync flag']
  #allocation19 [shape = 's32[]', space=sflag, size = 0x4, offset = 0, fixed_abs, tag = 'sflag constant byte address 0x0 - dummy sync flag']
  #allocation20 [shape = 's32[]', space=sflag, size = 0x4, offset = 0, fixed_abs, tag = 'sflag constant byte address 0x0 - dummy sync flag']
  #allocation21 [shape = 's32[]', space=sflag, size = 0x4, offset = 0, fixed_abs, tag = 'sflag constant byte address 0x0 - dummy sync flag']
  #allocation22 [shape = 's32[]', space=sflag, size = 0x4, offset = 0, fixed_abs, tag = 'sflag constant byte address 0x0 - dummy sync flag']
  #allocation23 [shape = 's32[]', space=sflag, size = 0x4, offset = 0, fixed_abs, tag = 'sflag constant byte address 0x0 - dummy sync flag']
  #allocation24 [shape = 's32[]', space=sflag, size = 0x4, offset = 0, fixed_abs, tag = 'sflag constant byte address 0x0 - dummy sync flag']
  %s0 = inlined_call_operand.hbm [shape: s32[16], index: 0, kind: input, shape index: {}]
  %s1 = inlined_call_operand.hbm [shape: f32[512,128], index: 1, kind: input, shape index: {}]
  %s2 = inlined_call_operand.hbm [shape: f32[16,128], index: 2, kind: output, shape index: {}]
  %s3 = sld [smem:[#allocation0]]
  $region57: #{tpu_custom_call.1} parent=0
    _
  %s5 = ssub.s32 1, %s3
  %s6 = scalar_select 0, %s5, %s3
  %8 = dma.hbm_to_smem %s0, 16, [#allocation4], [#allocation3]
  %9 = dma.done [#allocation3], 16
  %10 = sfence
  $region1: #{tpu_custom_call.1} parent=0
    #allocation5 [shape = 'u8[8192]{0}', space=vmem, size = 0x2000, scoped, tag = 'output window, operand 0']
    #allocation6 [shape = 's32[2]{0}', space=sflag, size = 0x8, scoped, tag = 'scoped memory for tpu_custom_call.1']
    %11 = vsyncpa [#allocation6], 0
    %s12 = scalar_lea.sflag [#allocation6], 1
    %13 = vsyncpa %s12, 0
    loop: start=0, step=1, limit=3
    $region2: #{tpu_custom_call.1} parent=1 // loop_pre_header
      _
    $region3: #{tpu_custom_call.1} parent=1 // loop_header
      %s15 = sphi 0, %s19
      %p16 = scmp.ge.s32.totalorder %s15, 3
      %s24 = sphi 0, %s26
      %s27 = sphi 0, %s24
      %s37 = sphi 0, %s27
    $region4: #{tpu_custom_call.1} parent=1 // loop_header_branch
      %18 = sbr.rel (%p16) target = $region8
    $region5: #{tpu_custom_call.1} parent=1 // loop_body
      %s20 = ssub.s32 %s15, 1
      %s21 = sadd.s32 %s15, 1
      %s22 = ssub.s32 %s15, %s21
      %p23 = scmp.eq.s32.totalorder %s22, 0
      %s25 = sadd.s32 %s24, 1
      %s26 = scalar_select %p23, %s24, %s25
      %p28 = pneg %p23
      %p29 = scmp.eq.s32.totalorder %s15, 1
      %p30 = por %p28, %p29
      %p31 = scmp.ne.s32.totalorder %s24, %s27
      %p32 = scmp.eq.s32.totalorder %s15, 0
      %p33 = por %p31, %p32
      %p34 = scmp.ne.s32.totalorder %s24, %s27
      %p35 = scmp.eq.s32.totalorder %s20, 1
      %p36 = por %p34, %p35
      %p38 = scmp.ne.s32.totalorder %s27, %s37
      %p39 = scmp.eq.s32.totalorder %s20, 0
      %p40 = por %p38, %p39
      %p41 = scmp.lt.s32.totalorder %s15, 2
      // Predicated region
      $region9: #{tpu_custom_call.1} parent=5 // pred_check
        %p42 = pneg %p41
      $region10: #{tpu_custom_call.1} parent=5 // pred_check_branch
        %44 = sbr.rel (%p42) target = $region12
      $region11: #{tpu_custom_call.1} parent=5 // pred_region
        %p45 = pneg %p33
        %p46 = pneg %p30
        %s47 = sand.u32 %s24, 1
        %s48 = scalar_lea.sflag [#allocation6], %s47
        %s49 = sand.u32 %s24, 1
        %s50 = smul.addr %s49, 8
        %s51 = scalar_lea.vmem [#allocation5], %s50
        %s52 = smul.u32 %s15, 8
        %s53 = sld [smem:[#allocation4 + %s52]]
        %s54 = smul.addr %s53, 16
        %s55 = scalar_lea.hbm %s1, %s54
        // Predicated region
        $region13: #{tpu_custom_call.1} parent=11 // pred_check
          _
        $region14: #{tpu_custom_call.1} parent=11 // pred_check_branch
          %57 = sbr.rel target = $region16
        $region15: #{tpu_custom_call.1} parent=11 // pred_region
          %58 = sst [smem:[#allocation9]] [#allocation8]
          %59 = sst [smem:[#allocation10]] [#allocation7]
        $region16: #{tpu_custom_call.1} parent=11 // pred_fallthru
          _
        %61 = shalt.err (0)
        %s63 = sshll.u32 %s51, 4
        %s64 = int_to_ptr.vmem [resolvable:$true] %s63
        %66 = dma.hbm_to_vmem [thread:$0]  %s55, 16, %s64, [#allocation2]
        %s67 = sadd.s32 %s52, 1
        %s68 = sld [smem:[#allocation4 + %s67]]
        %s69 = smul.addr %s68, 16
        %s70 = scalar_lea.hbm %s1, %s69
        %s71 = scalar_lea.vmem %s51, 1 [#allocation5]
        // Predicated region
        $region17: #{tpu_custom_call.1} parent=11 // pred_check
          _
        $region18: #{tpu_custom_call.1} parent=11 // pred_check_branch
          %73 = sbr.rel target = $region20
        $region19: #{tpu_custom_call.1} parent=11 // pred_region
          %74 = sst [smem:[#allocation9]] [#allocation12]
          %75 = sst [smem:[#allocation10]] [#allocation11]
        $region20: #{tpu_custom_call.1} parent=11 // pred_fallthru
          _
        %77 = shalt.err (0)
        %s79 = sshll.u32 %s71, 4
        %s80 = int_to_ptr.vmem [resolvable:$true] %s79
        %82 = dma.hbm_to_vmem [thread:$0]  %s70, 16, %s80, [#allocation2]
        %s83 = sadd.s32 %s52, 2
        %s84 = sld [smem:[#allocation4 + %s83]]
        %s85 = smul.addr %s84, 16
        %s86 = scalar_lea.hbm %s1, %s85
        %s87 = scalar_lea.vmem %s51, 2 [#allocation5]
        // Predicated region
        $region21: #{tpu_custom_call.1} parent=11 // pred_check
          _
        $region22: #{tpu_custom_call.1} parent=11 // pred_check_branch
          %89 = sbr.rel target = $region24
        $region23: #{tpu_custom_call.1} parent=11 // pred_region
          %90 = sst [smem:[#allocation9]] [#allocation14]
          %91 = sst [smem:[#allocation10]] [#allocation13]
        $region24: #{tpu_custom_call.1} parent=11 // pred_fallthru
          _
        %93 = shalt.err (0)
        %s95 = sshll.u32 %s87, 4
        %s96 = int_to_ptr.vmem [resolvable:$true] %s95
        %98 = dma.hbm_to_vmem [thread:$0]  %s86, 16, %s96, [#allocation2]
        %s99 = sadd.s32 %s52, 3
        %s100 = sld [smem:[#allocation4 + %s99]]
        %s101 = smul.addr %s100, 16
        %s102 = scalar_lea.hbm %s1, %s101
        %s103 = scalar_lea.vmem %s51, 3 [#allocation5]
        // Predicated region
        $region25: #{tpu_custom_call.1} parent=11 // pred_check
          _
        $region26: #{tpu_custom_call.1} parent=11 // pred_check_branch
          %105 = sbr.rel target = $region28
        $region27: #{tpu_custom_call.1} parent=11 // pred_region
          %106 = sst [smem:[#allocation9]] [#allocation16]
          %107 = sst [smem:[#allocation10]] [#allocation15]
        $region28: #{tpu_custom_call.1} parent=11 // pred_fallthru
          _
        %109 = shalt.err (0)
        %s111 = sshll.u32 %s103, 4
        %s112 = int_to_ptr.vmem [resolvable:$true] %s111
        %114 = dma.hbm_to_vmem [thread:$0]  %s102, 16, %s112, [#allocation2]
        %s115 = sadd.s32 %s52, 4
        %s116 = sld [smem:[#allocation4 + %s115]]
        %s117 = smul.addr %s116, 16
        %s118 = scalar_lea.hbm %s1, %s117
        %s119 = scalar_lea.vmem %s51, 4 [#allocation5]
        // Predicated region
        $region29: #{tpu_custom_call.1} parent=11 // pred_check
          _
        $region30: #{tpu_custom_call.1} parent=11 // pred_check_branch
          %121 = sbr.rel target = $region32
        $region31: #{tpu_custom_call.1} parent=11 // pred_region
          %122 = sst [smem:[#allocation9]] [#allocation18]
          %123 = sst [smem:[#allocation10]] [#allocation17]
        $region32: #{tpu_custom_call.1} parent=11 // pred_fallthru
          _
        %125 = shalt.err (0)
        %s127 = sshll.u32 %s119, 4
        %s128 = int_to_ptr.vmem [resolvable:$true] %s127
        %130 = dma.hbm_to_vmem [thread:$0]  %s118, 16, %s128, [#allocation2]
        %s131 = sadd.s32 %s52, 5
        %s132 = sld [smem:[#allocation4 + %s131]]
        %s133 = smul.addr %s132, 16
        %s134 = scalar_lea.hbm %s1, %s133
        %s135 = scalar_lea.vmem %s51, 5 [#allocation5]
        // Predicated region
        $region33: #{tpu_custom_call.1} parent=11 // pred_check
          _
        $region34: #{tpu_custom_call.1} parent=11 // pred_check_branch
          %137 = sbr.rel target = $region36
        $region35: #{tpu_custom_call.1} parent=11 // pred_region
          %138 = sst [smem:[#allocation9]] [#allocation20]
          %139 = sst [smem:[#allocation10]] [#allocation19]
        $region36: #{tpu_custom_call.1} parent=11 // pred_fallthru
          _
        %141 = shalt.err (0)
        %s143 = sshll.u32 %s135, 4
        %s144 = int_to_ptr.vmem [resolvable:$true] %s143
        %146 = dma.hbm_to_vmem [thread:$0]  %s134, 16, %s144, [#allocation2]
        %s147 = sadd.s32 %s52, 6
        %s148 = sld [smem:[#allocation4 + %s147]]
        %s149 = smul.addr %s148, 16
        %s150 = scalar_lea.hbm %s1, %s149
        %s151 = scalar_lea.vmem %s51, 6 [#allocation5]
        // Predicated region
        $region37: #{tpu_custom_call.1} parent=11 // pred_check
          _
        $region38: #{tpu_custom_call.1} parent=11 // pred_check_branch
          %153 = sbr.rel target = $region40
        $region39: #{tpu_custom_call.1} parent=11 // pred_region
          %154 = sst [smem:[#allocation9]] [#allocation22]
          %155 = sst [smem:[#allocation10]] [#allocation21]
        $region40: #{tpu_custom_call.1} parent=11 // pred_fallthru
          _
        %157 = shalt.err (0)
        %s159 = sshll.u32 %s151, 4
        %s160 = int_to_ptr.vmem [resolvable:$true] %s159
        %162 = dma.hbm_to_vmem [thread:$0]  %s150, 16, %s160, [#allocation2]
        %s163 = sadd.s32 %s52, 7
        %s164 = sld [smem:[#allocation4 + %s163]]
        %s165 = smul.addr %s164, 16
        %s166 = scalar_lea.hbm %s1, %s165
        %s167 = scalar_lea.vmem %s51, 7 [#allocation5]
        // Predicated region
        $region41: #{tpu_custom_call.1} parent=11 // pred_check
          _
        $region42: #{tpu_custom_call.1} parent=11 // pred_check_branch
          %169 = sbr.rel target = $region44
        $region43: #{tpu_custom_call.1} parent=11 // pred_region
          %170 = sst [smem:[#allocation9]] [#allocation24]
          %171 = sst [smem:[#allocation10]] [#allocation23]
        $region44: #{tpu_custom_call.1} parent=11 // pred_fallthru
          _
        %173 = shalt.err (0)
        %s175 = sshll.u32 %s167, 4
        %s176 = int_to_ptr.vmem [resolvable:$true] %s175
        %178 = dma.hbm_to_vmem [thread:$0]  %s166, 16, %s176, [#allocation2]
        %s179 = sld [smem:[#allocation4 + %s52]]
        %181 = dma.done [#allocation2], 16
        %s182 = sld [smem:[#allocation4 + %s67]]
        %184 = dma.done [#allocation2], 16
        %s185 = sld [smem:[#allocation4 + %s83]]
        %187 = dma.done [#allocation2], 16
        %s188 = sld [smem:[#allocation4 + %s99]]
        %190 = dma.done [#allocation2], 16
        %s191 = sld [smem:[#allocation4 + %s115]]
        %193 = dma.done [#allocation2], 16
        %s194 = sld [smem:[#allocation4 + %s131]]
        %196 = dma.done [#allocation2], 16
        %s197 = sld [smem:[#allocation4 + %s147]]
        %199 = dma.done [#allocation2], 16
        %s200 = sld [smem:[#allocation4 + %s163]]
        %202 = dma.done [#allocation2], 16
        %v203 = vld [vmem:[%s51] sm:$0xff]
        %v204 = vmul.f32 %v203, 11.313708
        %205 = vst [vmem:[%s51] sm:$0xff] %v204
        %s206 = sand.u32 %s24, 1
        %s207 = scalar_lea.sflag [#allocation6], %s206
        %s208 = sand.u32 %s24, 1
        %s209 = smul.addr %s208, 8
        %s210 = scalar_lea.vmem [#allocation5], %s209
        // Predicated region
        $region45: #{tpu_custom_call.1} parent=11 // pred_check
          %p211 = pneg %p30
        $region46: #{tpu_custom_call.1} parent=11 // pred_check_branch
          %213 = sbr.rel (%p211) target = $region48
        $region47: #{tpu_custom_call.1} parent=11 // pred_region
          %s215 = ssub.s32 128, 128
          %216 = vsyncadd %s207, %s215
          %s217 = smul.addr %s15, 128
          %s218 = scalar_lea.hbm %s2, %s217
          %s220 = sshll.u32 %s210, 4
          %s221 = int_to_ptr.vmem [resolvable:$true] %s220
          %223 = dma.vmem_to_hbm [thread:$0]  %s221, 128, %s218, %s207
        $region48: #{tpu_custom_call.1} parent=11 // pred_fallthru
          _
      $region12: #{tpu_custom_call.1} parent=5 // pred_fallthru
        _
      %p224 = scmp.le.s32.totalorder 1, %s15
      // Predicated region
      $region49: #{tpu_custom_call.1} parent=5 // pred_check
        %p225 = pneg %p224
      $region50: #{tpu_custom_call.1} parent=5 // pred_check_branch
        %227 = sbr.rel (%p225) target = $region52
      $region51: #{tpu_custom_call.1} parent=5 // pred_region
        %s228 = ssub.s32 %s15, 1
        // Predicated region
        $region53: #{tpu_custom_call.1} parent=51 // pred_check
          %p229 = pneg %p36
        $region54: #{tpu_custom_call.1} parent=51 // pred_check_branch
          %231 = sbr.rel (%p229) target = $region56
        $region55: #{tpu_custom_call.1} parent=51 // pred_region
          %s232 = sand.u32 %s27, 1
          %s233 = scalar_lea.sflag [#allocation6], %s232
          %s234 = sand.u32 %s27, 1
          %s235 = smul.addr %s234, 8
          %s236 = scalar_lea.vmem [#allocation5], %s235
          %237 = dma.done %s233, 128
        $region56: #{tpu_custom_call.1} parent=51 // pred_fallthru
          _
      $region52: #{tpu_custom_call.1} parent=5 // pred_fallthru
        _
    $region6: #{tpu_custom_call.1} parent=1 // loop_footer
      %s19 = sadd.s32 1, %s15
    $region7: #{tpu_custom_call.1} parent=1 // loop_footer_branch
      %14 = sbr.rel target = $region3
    $region8: #{tpu_custom_call.1} parent=1 // loop_exit
      _
    %238 = vsyncpa [#allocation6], 1
    %s239 = scalar_lea.sflag [#allocation6], 1
    %240 = vsyncpa %s239, 1
  %241 = vsyncmov [#allocation2]
  %s242 = vpop.sfrf %241
  %p243 = scmp.eq.s32.totalorder %s242, 0
  %p244 = pneg %p243
  %246 = shalt.err (%p244)

</llo_original>
